<compile_context>
chip_gen: v6e
topology: v6e:2x2x1
jax: 0.10.0
libtpu: 0.0.40
codegen_flags: <defaults>
</compile_context>

<pallas_src>
import jax
import jax.numpy as jnp
import numpy as np
from jax.experimental import pallas as pl
from jax.experimental.pallas import tpu as pltpu


def _gelu_erf(x):
    """Exact-GELU, erf via Abramowitz-Stegun 7.1.26 (max abs err ~1.5e-7)."""
    p = 0.3275911
    a1, a2, a3, a4, a5 = (0.254829592, -0.284496736, 1.421413741,
                          -1.453152027, 1.061405429)
    z = x * 0.7071067811865476          # x / sqrt(2)
    az = jnp.abs(z)
    t = 1.0 / (1.0 + p * az)
    poly = ((((a5 * t + a4) * t + a3) * t + a2) * t + a1) * t
    erf_abs = 1.0 - poly * jnp.exp(-az * az)
    erf_z = jnp.where(z >= 0.0, erf_abs, -erf_abs)
    return 0.5 * x * (1.0 + erf_z)


def _out_stage3_kernel(x_ref, w1_ref, b1_ref, w2_ref, b2_ref, o_ref):
    x = x_ref[...]                                                    # (TM, 2*dim)
    h = jnp.dot(x, w1_ref[...], preferred_element_type=jnp.float32) + b1_ref[...]
    h = _gelu_erf(h)                                                  # (TM, dim)
    o = jnp.dot(h, w2_ref[...], preferred_element_type=jnp.float32) + b2_ref[...]
    o_ref[...] = o.astype(o_ref.dtype)                                # (TM, L) lane-dense


def _round_up(v, m):
    return (v + m - 1) // m * m


def out_stage3(x, params, *, block_rows=512):
    """params use the PyTorch convention W:(out, in):
         w1: (dim, 2*dim), b1: (dim,), w2: (num_label, dim), b2: (num_label,)
    Returns gelu(x @ w1.T + b1) @ w2.T + b2 with the same leading dims as x."""
    *lead, d_in = x.shape
    w1, b1, w2, b2 = params['w1'], params['b1'], params['w2'], params['b2']
    dim = w1.shape[0]
    num_label = w2.shape[0]
    assert w1.shape == (dim, d_in) and w2.shape == (num_label, dim)

    # ---- wrapper-side layout plumbing (no in-kernel transposes / masked stores) ----
    w1t = w1.T                                         # (2*dim, dim)
    w2t = w2.T                                         # (dim, num_label)
    L = _round_up(num_label, 128)                      # lane-dense output slab
    w2t = jnp.pad(w2t, ((0, 0), (0, L - num_label)))
    b1r = b1.reshape(1, dim)
    b2r = jnp.pad(b2, (0, L - num_label)).reshape(1, L)

    x2 = x.reshape(-1, d_in)                           # flatten batch/seq -> rows
    M = x2.shape[0]
    TM = min(block_rows, _round_up(M, 8))              # row tile (multiple of 8)
    Mp = _round_up(M, TM)
    if Mp != M:
        x2 = jnp.pad(x2, ((0, Mp - M), (0, 0)))

    out = pl.pallas_call(
        _out_stage3_kernel,
        out_shape=jax.ShapeDtypeStruct((Mp, L), x.dtype),
        grid=(Mp // TM,),
        in_specs=[
            pl.BlockSpec((TM, d_in), lambda i: (i, 0)),   # x rows
            pl.BlockSpec((d_in, dim), lambda i: (0, 0)),  # w1.T (resident)
            pl.BlockSpec((1, dim), lambda i: (0, 0)),     # b1
            pl.BlockSpec((dim, L), lambda i: (0, 0)),     # w2.T padded (resident)
            pl.BlockSpec((1, L), lambda i: (0, 0)),       # b2 padded
        ],
        out_specs=pl.BlockSpec((TM, L), lambda i: (i, 0)),
        compiler_params=pltpu.CompilerParams(
            dimension_semantics=("parallel",)),
    )(x2, w1t, b1r, w2t, b2r)

    return out[:M, :num_label].reshape(*lead, num_label)


def reference(x, params):
    h = x @ params['w1'].T + params['b1']
    h = jax.nn.gelu(h, approximate=False)               # exact erf-GELU (PyTorch default)
    return h @ params['w2'].T + params['b2']


if __name__ == "__main__":
    B, N, dim, num_label = 2, 16, 32, 3
    key = jax.random.PRNGKey(0)
    k1, k2, k3, k4, k5 = jax.random.split(key, 5)

    # NOTE: the module zero-initialises all weights (output would be all zero);
    # random weights are used here so the numerical check is meaningful.
    params = {
        'w1': jax.random.normal(k1, (dim, 2 * dim), jnp.float32) * 0.1,
        'b1': jax.random.normal(k2, (dim,), jnp.float32) * 0.1,
        'w2': jax.random.normal(k3, (num_label, dim), jnp.float32) * 0.1,
        'b2': jax.random.normal(k4, (num_label,), jnp.float32) * 0.1,
    }
    x = jax.random.normal(k5, (B, N, 2 * dim), jnp.float32)

    out = out_stage3(x, params)
    jax.block_until_ready(out)

    ref = reference(x, params)
    np.testing.assert_allclose(np.asarray(out), np.asarray(ref), rtol=1e-3, atol=1e-3)
    print("KERNEL_OK")
</pallas_src>

<mosaic_0001>
module attributes {stable_mosaic.version = 11 : i64} {
  func.func @_out_stage3_kernel(%arg0: i32, %arg1: memref<32x64xf32, #tpu.memory_space<vmem>>, %arg2: memref<64x32xf32, #tpu.memory_space<vmem>>, %arg3: memref<1x32xf32, #tpu.memory_space<vmem>>, %arg4: memref<32x128xf32, #tpu.memory_space<vmem>>, %arg5: memref<1x128xf32, #tpu.memory_space<vmem>>, %arg6: memref<32x128xf32, #tpu.memory_space<vmem>>) attributes {dimension_semantics = [#tpu.dimension_semantics<parallel>], iteration_bounds = array<i64: 1>, scalar_prefetch = 0 : i64, scratch_operands = 0 : i64, tpu.core_type = #tpu.core_type<tc>, window_params = [{transform_indices = @transform_0, window_bounds = array<i64: 32, 64>}, {pipeline_mode = #tpu.pipeline_mode<synchronous>, transform_indices = @transform_1, window_bounds = array<i64: 64, 32>}, {pipeline_mode = #tpu.pipeline_mode<synchronous>, transform_indices = @transform_2, window_bounds = array<i64: 1, 32>}, {pipeline_mode = #tpu.pipeline_mode<synchronous>, transform_indices = @transform_3, window_bounds = array<i64: 32, 128>}, {pipeline_mode = #tpu.pipeline_mode<synchronous>, transform_indices = @transform_4, window_bounds = array<i64: 1, 128>}, {transform_indices = @transform_5, window_bounds = array<i64: 32, 128>}]} {
    %c0 = arith.constant 0 : index
    %c0_0 = arith.constant 0 : index
    %0 = vector.load %arg1[%c0, %c0_0] : memref<32x64xf32, #tpu.memory_space<vmem>>, vector<32x64xf32>
    %c0_1 = arith.constant 0 : index
    %c0_2 = arith.constant 0 : index
    %1 = vector.load %arg2[%c0_1, %c0_2] : memref<64x32xf32, #tpu.memory_space<vmem>>, vector<64x32xf32>
    %cst = arith.constant dense<0.000000e+00> : vector<32x32xf32>
    %2 = tpu.matmul %0, %1, %cst {dimension_numbers = #tpu.dot_dimension_numbers<[1], [0], [0], [1], [0, 0, 1, 1], [], []>} : vector<32x64xf32>, vector<64x32xf32>, vector<32x32xf32> -> vector<32x32xf32>
    %c0_3 = arith.constant 0 : index
    %c0_4 = arith.constant 0 : index
    %3 = vector.load %arg3[%c0_3, %c0_4] : memref<1x32xf32, #tpu.memory_space<vmem>>, vector<1x32xf32>
    %4 = vector.broadcast %3 : vector<1x32xf32> to vector<32x32xf32>
    %5 = arith.addf %2, %4 : vector<32x32xf32>
    %cst_5 = arith.constant 0.707106769 : f32
    %6 = vector.broadcast %cst_5 : f32 to vector<32x32xf32>
    %7 = arith.mulf %5, %6 : vector<32x32xf32>
    %8 = math.absf %7 : vector<32x32xf32>
    %cst_6 = arith.constant 0.327591091 : f32
    %9 = vector.broadcast %cst_6 : f32 to vector<32x32xf32>
    %10 = arith.mulf %9, %8 : vector<32x32xf32>
    %cst_7 = arith.constant 1.000000e+00 : f32
    %11 = vector.broadcast %cst_7 : f32 to vector<32x32xf32>
    %12 = arith.addf %11, %10 : vector<32x32xf32>
    %cst_8 = arith.constant 1.000000e+00 : f32
    %13 = vector.broadcast %cst_8 : f32 to vector<32x32xf32>
    %14 = arith.divf %13, %12 : vector<32x32xf32>
    %cst_9 = arith.constant 1.06140542 : f32
    %15 = vector.broadcast %cst_9 : f32 to vector<32x32xf32>
    %16 = arith.mulf %15, %14 : vector<32x32xf32>
    %cst_10 = arith.constant -1.45315206 : f32
    %17 = vector.broadcast %cst_10 : f32 to vector<32x32xf32>
    %18 = arith.addf %16, %17 : vector<32x32xf32>
    %19 = arith.mulf %18, %14 : vector<32x32xf32>
    %cst_11 = arith.constant 1.42141378 : f32
    %20 = vector.broadcast %cst_11 : f32 to vector<32x32xf32>
    %21 = arith.addf %19, %20 : vector<32x32xf32>
    %22 = arith.mulf %21, %14 : vector<32x32xf32>
    %cst_12 = arith.constant -0.284496725 : f32
    %23 = vector.broadcast %cst_12 : f32 to vector<32x32xf32>
    %24 = arith.addf %22, %23 : vector<32x32xf32>
    %25 = arith.mulf %24, %14 : vector<32x32xf32>
    %cst_13 = arith.constant 0.254829586 : f32
    %26 = vector.broadcast %cst_13 : f32 to vector<32x32xf32>
    %27 = arith.addf %25, %26 : vector<32x32xf32>
    %28 = arith.mulf %27, %14 : vector<32x32xf32>
    %cst_14 = arith.constant 0.000000e+00 : f32
    %29 = vector.broadcast %cst_14 : f32 to vector<32x32xf32>
    %30 = arith.subf %29, %8 : vector<32x32xf32>
    %31 = arith.mulf %30, %8 : vector<32x32xf32>
    %32 = math.exp %31 : vector<32x32xf32>
    %33 = arith.mulf %28, %32 : vector<32x32xf32>
    %cst_15 = arith.constant 1.000000e+00 : f32
    %34 = vector.broadcast %cst_15 : f32 to vector<32x32xf32>
    %35 = arith.subf %34, %33 : vector<32x32xf32>
    %cst_16 = arith.constant 0.000000e+00 : f32
    %36 = vector.broadcast %cst_16 : f32 to vector<32x32xf32>
    %37 = arith.cmpf oge, %7, %36 : vector<32x32xf32>
    %cst_17 = arith.constant 0.000000e+00 : f32
    %38 = vector.broadcast %cst_17 : f32 to vector<32x32xf32>
    %39 = arith.subf %38, %35 : vector<32x32xf32>
    %40 = arith.select %37, %35, %39 : vector<32x32xi1>, vector<32x32xf32>
    %cst_18 = arith.constant 5.000000e-01 : f32
    %41 = vector.broadcast %cst_18 : f32 to vector<32x32xf32>
    %42 = arith.mulf %41, %5 : vector<32x32xf32>
    %cst_19 = arith.constant 1.000000e+00 : f32
    %43 = vector.broadcast %cst_19 : f32 to vector<32x32xf32>
    %44 = arith.addf %43, %40 : vector<32x32xf32>
    %45 = arith.mulf %42, %44 : vector<32x32xf32>
    %c0_20 = arith.constant 0 : index
    %c0_21 = arith.constant 0 : index
    %46 = vector.load %arg4[%c0_20, %c0_21] : memref<32x128xf32, #tpu.memory_space<vmem>>, vector<32x128xf32>
    %cst_22 = arith.constant dense<0.000000e+00> : vector<32x128xf32>
    %47 = tpu.matmul %45, %46, %cst_22 {dimension_numbers = #tpu.dot_dimension_numbers<[1], [0], [0], [1], [0, 0, 1, 1], [], []>} : vector<32x32xf32>, vector<32x128xf32>, vector<32x128xf32> -> vector<32x128xf32>
    %c0_23 = arith.constant 0 : index
    %c0_24 = arith.constant 0 : index
    %48 = vector.load %arg5[%c0_23, %c0_24] : memref<1x128xf32, #tpu.memory_space<vmem>>, vector<1x128xf32>
    %49 = vector.broadcast %48 : vector<1x128xf32> to vector<32x128xf32>
    %50 = arith.addf %47, %49 : vector<32x128xf32>
    %c0_25 = arith.constant 0 : index
    %c0_26 = arith.constant 0 : index
    %51 = vector.load %arg6[%c0_25, %c0_26] : memref<32x128xf32, #tpu.memory_space<vmem>>, vector<32x128xf32>
    tpu.vector_store %arg6[%c0_25, %c0_26], %50 {strides = array<i32>} : memref<32x128xf32, #tpu.memory_space<vmem>>, vector<32x128xf32>,
    return
  }
  func.func @transform_0(%arg0: i32) -> (i32, i32) {
    %c0_i32 = arith.constant 0 : i32
    %c0_i32_0 = arith.constant 0 : i32
    return %arg0, %c0_i32 : i32, i32
  }
  func.func @transform_1(%arg0: i32) -> (i32, i32) {
    %c0_i32 = arith.constant 0 : i32
    %c0_i32_0 = arith.constant 0 : i32
    %c0_i32_1 = arith.constant 0 : i32
    return %c0_i32, %c0_i32_0 : i32, i32
  }
  func.func @transform_2(%arg0: i32) -> (i32, i32) {
    %c0_i32 = arith.constant 0 : i32
    %c0_i32_0 = arith.constant 0 : i32
    %c0_i32_1 = arith.constant 0 : i32
    return %c0_i32, %c0_i32_0 : i32, i32
  }
  func.func @transform_3(%arg0: i32) -> (i32, i32) {
    %c0_i32 = arith.constant 0 : i32
    %c0_i32_0 = arith.constant 0 : i32
    %c0_i32_1 = arith.constant 0 : i32
    return %c0_i32, %c0_i32_0 : i32, i32
  }
  func.func @transform_4(%arg0: i32) -> (i32, i32) {
    %c0_i32 = arith.constant 0 : i32
    %c0_i32_0 = arith.constant 0 : i32
    %c0_i32_1 = arith.constant 0 : i32
    return %c0_i32, %c0_i32_0 : i32, i32
  }
  func.func @transform_5(%arg0: i32) -> (i32, i32) {
    %c0_i32 = arith.constant 0 : i32
    %c0_i32_0 = arith.constant 0 : i32
    return %arg0, %c0_i32 : i32, i32
  }
}

</mosaic_0001>

<llo_original>
// kernel: tpu_custom_call.1
$region0: #{tpu_custom_call.1}
  #allocation0 [shape = 'u32[]', space=smem, size = 0x4, offset = 0x4, fixed_abs, tag = 'smem constant byte address 0x4 - core index']
  #allocation1 [shape = 'u32[144,128]{1,0:T(1,128)}', space=vmem, size = 0x12000, scoped, tag = 'internal scratch']
  %s0 = inlined_call_operand.vmem [shape: f32[32,64], index: 0, kind: input, shape index: {}]
  %s1 = inlined_call_operand.vmem [shape: f32[64,32], index: 1, kind: input, shape index: {}]
  %s2 = inlined_call_operand.vmem [shape: f32[1,32], index: 2, kind: input, shape index: {}]
  %s3 = inlined_call_operand.vmem [shape: f32[32,128], index: 3, kind: input, shape index: {}]
  %s4 = inlined_call_operand.vmem [shape: f32[1,128], index: 4, kind: input, shape index: {}]
  %s5 = inlined_call_operand.hbm [shape: f32[32,128], index: 5, kind: output, shape index: {}]
  %s6 = sld [smem:[#allocation0]]
  $region30: #{tpu_custom_call.1} parent=0
    _
  %s8 = ssub.s32 1, %s6
  %s9 = scalar_select 0, %s8, %s6
  $region1: #{tpu_custom_call.1} parent=0
    #allocation2 [shape = 'u8[16384]{0}', space=vmem, size = 0x4000, scoped, tag = 'output window, operand 0, single buffered']
    #allocation3 [shape = 's32[1]{0}', space=sflag, size = 0x4, scoped, tag = 'scoped memory for tpu_custom_call.1']
    %10 = vsyncpa [#allocation3], 0
    // Predicated region
    $region2: #{tpu_custom_call.1} parent=1 // pred_check
      _
    $region3: #{tpu_custom_call.1} parent=1 // pred_check_branch
      %12 = sbr.rel (0) target = $region5
    $region4: #{tpu_custom_call.1} parent=1 // pred_region
      _
    $region5: #{tpu_custom_call.1} parent=1 // pred_fallthru
      _
    // Predicated region
    $region6: #{tpu_custom_call.1} parent=1 // pred_check
      _
    $region7: #{tpu_custom_call.1} parent=1 // pred_check_branch
      %14 = sbr.rel (0) target = $region9
    $region8: #{tpu_custom_call.1} parent=1 // pred_region
      _
    $region9: #{tpu_custom_call.1} parent=1 // pred_fallthru
      _
    // Predicated region
    $region10: #{tpu_custom_call.1} parent=1 // pred_check
      _
    $region11: #{tpu_custom_call.1} parent=1 // pred_check_branch
      %16 = sbr.rel (0) target = $region13
    $region12: #{tpu_custom_call.1} parent=1 // pred_region
      _
    $region13: #{tpu_custom_call.1} parent=1 // pred_fallthru
      _
    // Predicated region
    $region14: #{tpu_custom_call.1} parent=1 // pred_check
      _
    $region15: #{tpu_custom_call.1} parent=1 // pred_check_branch
      %18 = sbr.rel (0) target = $region17
    $region16: #{tpu_custom_call.1} parent=1 // pred_region
      _
    $region17: #{tpu_custom_call.1} parent=1 // pred_fallthru
      _
    // Predicated region
    $region18: #{tpu_custom_call.1} parent=1 // pred_check
      _
    $region19: #{tpu_custom_call.1} parent=1 // pred_check_branch
      %20 = sbr.rel (0) target = $region21
    $region20: #{tpu_custom_call.1} parent=1 // pred_region
      _
    $region21: #{tpu_custom_call.1} parent=1 // pred_fallthru
      _
    %v21 = vld [vmem:[%s0] sm:$0xff]
    %v22 = vld [vmem:[%s0 + $0x8] sm:$0xff]
    %v23 = vld [vmem:[%s0 + $0x10] sm:$0xff]
    %v24 = vld [vmem:[%s0 + $0x18] sm:$0xff]
    %v25 = vld [vmem:[%s1] sm:$0xff]
    %v26 = vld [vmem:[%s1 + $0x8] sm:$0xff]
    %v27 = vld [vmem:[%s1 + $0x10] sm:$0xff]
    %v28 = vld [vmem:[%s1 + $0x18] sm:$0xff]
    %v29 = vld [vmem:[%s1 + $0x20] sm:$0xff]
    %v30 = vld [vmem:[%s1 + $0x28] sm:$0xff]
    %v31 = vld [vmem:[%s1 + $0x30] sm:$0xff]
    %v32 = vld [vmem:[%s1 + $0x38] sm:$0xff]
    %v33 = vld [vmem:[%s2] sm:$0x1]
    %v35 = vlaneseq
    %v36 = vshrl.u32 %v35, 7
    %v37 = vsub.s32 0, %v36
    %v38 = vrot.slane %v33, %v37
    %vm40 = vcmask 523264
    %v42 = vsel %vm40, %v21, 0
    %v45 = vsel %vm40, %v22, 0
    %v48 = vsel %vm40, %v23, 0
    %v51 = vsel %vm40, %v24, 0
    %53 = vmatprep.subr.mxu0 0.0
    %54 = vmatpush1.msra.mxu0 0.0
    %55 = vmatprep.subr.mxu0 0.0
    %56 = vmatpush1.msra.mxu0 0.0
    %57 = vmatprep.subr.mxu0 0.0
    %58 = vmatpush1.msra.mxu0 0.0
    %59 = vmatprep.subr.mxu0 0.0
    %60 = vmatpush1.msra.mxu0 0.0
    %61 = vmatprep.subr.mxu0 0.0
    %62 = vmatpush1.msra.mxu0 0.0
    %63 = vmatprep.subr.mxu0 0.0
    %64 = vmatpush1.msra.mxu0 0.0
    %65 = vmatprep.subr.mxu0 0.0
    %66 = vmatpush1.msra.mxu0 0.0
    %67 = vmatprep.subr.mxu0 0.0
    %68 = vmatpush1.msra.mxu0 0.0
    %69 = vmatprep.subr.mxu0 0.0
    %70 = vmatpush1.msra.mxu0 %v32
    %71 = vmatprep.subr.mxu0 0.0
    %72 = vmatpush1.msra.mxu0 %v31
    %73 = vmatprep.subr.mxu0 0.0
    %74 = vmatpush1.msra.mxu0 %v30
    %75 = vmatprep.subr.mxu0 0.0
    %76 = vmatpush1.msra.mxu0 %v29
    %77 = vmatprep.subr.mxu0 0.0
    %78 = vmatpush1.msra.mxu0 %v28
    %79 = vmatprep.subr.mxu0 0.0
    %80 = vmatpush1.msra.mxu0 %v27
    %81 = vmatprep.subr.mxu0 0.0
    %82 = vmatpush1.msra.mxu0 %v26
    %83 = vmatprep.subr.mxu0 0.0
    %84 = vmatpush1.msra.mxu0 %v25
    %85 = vmatprep.subr.mxu0 0.0
    %86 = vmatpush2.msra.mxu0 0.0
    %87 = vmatprep.subr.mxu0 0.0
    %88 = vmatpush2.msra.mxu0 0.0
    %89 = vmatprep.subr.mxu0 0.0
    %90 = vmatpush2.msra.mxu0 0.0
    %91 = vmatprep.subr.mxu0 0.0
    %92 = vmatpush2.msra.mxu0 0.0
    %93 = vmatprep.subr.mxu0 0.0
    %94 = vmatpush2.msra.mxu0 0.0
    %95 = vmatprep.subr.mxu0 0.0
    %96 = vmatpush2.msra.mxu0 0.0
    %97 = vmatprep.subr.mxu0 0.0
    %98 = vmatpush2.msra.mxu0 0.0
    %99 = vmatprep.subr.mxu0 0.0
    %100 = vmatpush2.msra.mxu0 0.0
    %101 = vmatprep.subr.mxu0 0.0
    %102 = vmatpush2.msra.mxu0 0.0
    %103 = vmatprep.subr.mxu0 0.0
    %104 = vmatpush2.msra.mxu0 0.0
    %105 = vmatprep.subr.mxu0 0.0
    %106 = vmatpush2.msra.mxu0 0.0
    %107 = vmatprep.subr.mxu0 0.0
    %108 = vmatpush2.msra.mxu0 0.0
    %109 = vmatprep.subr.mxu0 0.0
    %110 = vmatpush2.msra.mxu0 0.0
    %111 = vmatprep.subr.mxu0 0.0
    %112 = vmatpush2.msra.mxu0 0.0
    %113 = vmatprep.subr.mxu0 0.0
    %114 = vmatpush2.msra.mxu0 0.0
    %115 = vmatprep.subr.mxu0 0.0
    %116 = vmatpush2.msra.mxu0 0.0
    %117 = vmatprep.mubr.f32.mxu0 0.0
    %118 = vmatmul.mubr.f32.gmra.mxu0 %v42
    %v119 = vpop.f32.mrf.mxu0
    %v120 = vadd.f32 %v38, %v119
    %v121 = vpop.f32.mrf.mxu0
    %122 = vmatprep.mubr.f32.mxu0 0.0
    %123 = vmatmul.mubr.f32.gmra.mxu0 %v45
    %v124 = vpop.f32.mrf.mxu0
    %v125 = vadd.f32 %v38, %v124
    %v126 = vpop.f32.mrf.mxu0
    %127 = vmatprep.mubr.f32.mxu0 0.0
    %128 = vmatmul.mubr.f32.gmra.mxu0 %v48
    %v129 = vpop.f32.mrf.mxu0
    %v130 = vadd.f32 %v38, %v129
    %v131 = vpop.f32.mrf.mxu0
    %132 = vmatprep.mubr.f32.mxu0 0.0
    %133 = vmatmul.mubr.f32.gmra.mxu0 %v51
    %v134 = vpop.f32.mrf.mxu0
    %v135 = vadd.f32 %v38, %v134
    %v136 = vpop.f32.mrf.mxu0
    %137 = vdwg.mxu0
    %v138 = vmul.f32 %v120, 0.70710677
    %v139 = vmul.f32 %v125, 0.70710677
    %v140 = vmul.f32 %v130, 0.70710677
    %v141 = vmul.f32 %v135, 0.70710677
    %v142 = vand.u32 2147483647, %v138
    %v143 = vand.u32 2147483647, %v139
    %v144 = vand.u32 2147483647, %v140
    %v145 = vand.u32 2147483647, %v141
    %v146 = vmul.f32 %v142, 0.3275911
    %v147 = vmul.f32 %v143, 0.3275911
    %v148 = vmul.f32 %v144, 0.3275911
    %v149 = vmul.f32 %v145, 0.3275911
    %v150 = vadd.f32 %v146, 1.0
    %v151 = vadd.f32 %v147, 1.0
    %v152 = vadd.f32 %v148, 1.0
    %v153 = vadd.f32 %v149, 1.0
    %v154 = vrcp.pop %v150
    %v155 = vmul.f32 1.0, %v154
    %v156 = vrcp.pop %v151
    %v157 = vmul.f32 1.0, %v156
    %v158 = vrcp.pop %v152
    %v159 = vmul.f32 1.0, %v158
    %v160 = vrcp.pop %v153
    %v161 = vmul.f32 1.0, %v160
    %v162 = vmul.f32 %v155, 1.0614054
    %v163 = vmul.f32 %v157, 1.0614054
    %v164 = vmul.f32 %v159, 1.0614054
    %v165 = vmul.f32 %v161, 1.0614054
    %v166 = vadd.f32 %v162, -1.4531521
    %v167 = vadd.f32 %v163, -1.4531521
    %v168 = vadd.f32 %v164, -1.4531521
    %v169 = vadd.f32 %v165, -1.4531521
    %v170 = vmul.f32 %v166, %v155
    %v171 = vmul.f32 %v167, %v157
    %v172 = vmul.f32 %v168, %v159
    %v173 = vmul.f32 %v169, %v161
    %v174 = vadd.f32 %v170, 1.4214138
    %v175 = vadd.f32 %v171, 1.4214138
    %v176 = vadd.f32 %v172, 1.4214138
    %v177 = vadd.f32 %v173, 1.4214138
    %v178 = vmul.f32 %v174, %v155
    %v179 = vmul.f32 %v175, %v157
    %v180 = vmul.f32 %v176, %v159
    %v181 = vmul.f32 %v177, %v161
    %v182 = vadd.f32 %v178, -0.28449672
    %v183 = vadd.f32 %v179, -0.28449672
    %v184 = vadd.f32 %v180, -0.28449672
    %v185 = vadd.f32 %v181, -0.28449672
    %v186 = vmul.f32 %v182, %v155
    %v187 = vmul.f32 %v183, %v157
    %v188 = vmul.f32 %v184, %v159
    %v189 = vmul.f32 %v185, %v161
    %v190 = vadd.f32 %v186, 0.2548296
    %v191 = vadd.f32 %v187, 0.2548296
    %v192 = vadd.f32 %v188, 0.2548296
    %v193 = vadd.f32 %v189, 0.2548296
    %v194 = vmul.f32 %v190, %v155
    %v195 = vmul.f32 %v191, %v157
    %v196 = vmul.f32 %v192, %v159
    %v197 = vmul.f32 %v193, %v161
    %v198 = vsub.f32 0.0, %v142
    %v199 = vsub.f32 0.0, %v143
    %v200 = vsub.f32 0.0, %v144
    %v201 = vsub.f32 0.0, %v145
    %v202 = vmul.f32 %v198, %v142
    %v203 = vmul.f32 %v199, %v143
    %v204 = vmul.f32 %v200, %v144
    %v205 = vmul.f32 %v201, %v145
    %v206 = vmul.f32 %v202, 1.442695
    %v207 = vpow.pop %v206
    %v208 = vmul.f32 %v203, 1.442695
    %v209 = vpow.pop %v208
    %v210 = vmul.f32 %v204, 1.442695
    %v211 = vpow.pop %v210
    %v212 = vmul.f32 %v205, 1.442695
    %v213 = vpow.pop %v212
    %v214 = vmul.f32 %v194, %v207
    %v215 = vmul.f32 %v195, %v209
    %v216 = vmul.f32 %v196, %v211
    %v217 = vmul.f32 %v197, %v213
    %v218 = vsub.f32 1.0, %v214
    %v219 = vsub.f32 1.0, %v215
    %v220 = vsub.f32 1.0, %v216
    %v221 = vsub.f32 1.0, %v217
    %vm222 = vcmp.ge.f32.partialorder %v138, 0.0
    %vm223 = vcmp.ge.f32.partialorder %v139, 0.0
    %vm224 = vcmp.ge.f32.partialorder %v140, 0.0
    %vm225 = vcmp.ge.f32.partialorder %v141, 0.0
    %v226 = vsub.f32 0.0, %v218
    %v227 = vsub.f32 0.0, %v219
    %v228 = vsub.f32 0.0, %v220
    %v229 = vsub.f32 0.0, %v221
    %v230 = vsel %vm222, %v218, %v226
    %v231 = vsel %vm223, %v219, %v227
    %v232 = vsel %vm224, %v220, %v228
    %v233 = vsel %vm225, %v221, %v229
    %v234 = vmul.f32 %v120, 0.5
    %v235 = vmul.f32 %v125, 0.5
    %v236 = vmul.f32 %v130, 0.5
    %v237 = vmul.f32 %v135, 0.5
    %v238 = vadd.f32 %v230, 1.0
    %v239 = vadd.f32 %v231, 1.0
    %v240 = vadd.f32 %v232, 1.0
    %v241 = vadd.f32 %v233, 1.0
    %v242 = vmul.f32 %v234, %v238
    %v243 = vmul.f32 %v235, %v239
    %v244 = vmul.f32 %v236, %v240
    %v245 = vmul.f32 %v237, %v241
    %v246 = vld [vmem:[%s3] sm:$0xff]
    %v247 = vld [vmem:[%s3 + $0x8] sm:$0xff]
    %v248 = vld [vmem:[%s3 + $0x10] sm:$0xff]
    %v249 = vld [vmem:[%s3 + $0x18] sm:$0xff]
    %v250 = vld [vmem:[%s4] sm:$0x1]
    %v252 = vlaneseq
    %v253 = vshrl.u32 %v252, 7
    %v254 = vsub.s32 0, %v253
    %v255 = vrot.slane %v250, %v254
    %vm257 = vcmask 261120
    %v259 = vsel %vm257, %v242, 0
    %v262 = vsel %vm257, %v243, 0
    %v265 = vsel %vm257, %v244, 0
    %v268 = vsel %vm257, %v245, 0
    %270 = vmatprep.subr.mxu0 0.0
    %271 = vmatpush1.msra.mxu0 0.0
    %272 = vmatprep.subr.mxu0 0.0
    %273 = vmatpush1.msra.mxu0 0.0
    %274 = vmatprep.subr.mxu0 0.0
    %275 = vmatpush1.msra.mxu0 0.0
    %276 = vmatprep.subr.mxu0 0.0
    %277 = vmatpush1.msra.mxu0 0.0
    %278 = vmatprep.subr.mxu0 0.0
    %279 = vmatpush1.msra.mxu0 0.0
    %280 = vmatprep.subr.mxu0 0.0
    %281 = vmatpush1.msra.mxu0 0.0
    %282 = vmatprep.subr.mxu0 0.0
    %283 = vmatpush1.msra.mxu0 0.0
    %284 = vmatprep.subr.mxu0 0.0
    %285 = vmatpush1.msra.mxu0 0.0
    %286 = vmatprep.subr.mxu0 0.0
    %287 = vmatpush1.msra.mxu0 0.0
    %288 = vmatprep.subr.mxu0 0.0
    %289 = vmatpush1.msra.mxu0 0.0
    %290 = vmatprep.subr.mxu0 0.0
    %291 = vmatpush1.msra.mxu0 0.0
    %292 = vmatprep.subr.mxu0 0.0
    %293 = vmatpush1.msra.mxu0 0.0
    %294 = vmatprep.subr.mxu0 0.0
    %295 = vmatpush1.msra.mxu0 %v249
    %296 = vmatprep.subr.mxu0 0.0
    %297 = vmatpush1.msra.mxu0 %v248
    %298 = vmatprep.subr.mxu0 0.0
    %299 = vmatpush1.msra.mxu0 %v247
    %300 = vmatprep.subr.mxu0 0.0
    %301 = vmatpush1.msra.mxu0 %v246
    %302 = vmatprep.subr.mxu0 0.0
    %303 = vmatpush2.msra.mxu0 0.0
    %304 = vmatprep.subr.mxu0 0.0
    %305 = vmatpush2.msra.mxu0 0.0
    %306 = vmatprep.subr.mxu0 0.0
    %307 = vmatpush2.msra.mxu0 0.0
    %308 = vmatprep.subr.mxu0 0.0
    %309 = vmatpush2.msra.mxu0 0.0
    %310 = vmatprep.subr.mxu0 0.0
    %311 = vmatpush2.msra.mxu0 0.0
    %312 = vmatprep.subr.mxu0 0.0
    %313 = vmatpush2.msra.mxu0 0.0
    %314 = vmatprep.subr.mxu0 0.0
    %315 = vmatpush2.msra.mxu0 0.0
    %316 = vmatprep.subr.mxu0 0.0
    %317 = vmatpush2.msra.mxu0 0.0
    %318 = vmatprep.subr.mxu0 0.0
    %319 = vmatpush2.msra.mxu0 0.0
    %320 = vmatprep.subr.mxu0 0.0
    %321 = vmatpush2.msra.mxu0 0.0
    %322 = vmatprep.subr.mxu0 0.0
    %323 = vmatpush2.msra.mxu0 0.0
    %324 = vmatprep.subr.mxu0 0.0
    %325 = vmatpush2.msra.mxu0 0.0
    %326 = vmatprep.subr.mxu0 0.0
    %327 = vmatpush2.msra.mxu0 0.0
    %328 = vmatprep.subr.mxu0 0.0
    %329 = vmatpush2.msra.mxu0 0.0
    %330 = vmatprep.subr.mxu0 0.0
    %331 = vmatpush2.msra.mxu0 0.0
    %332 = vmatprep.subr.mxu0 0.0
    %333 = vmatpush2.msra.mxu0 0.0
    %334 = vmatprep.mubr.f32.mxu0 0.0
    %335 = vmatmul.mubr.f32.gmra.mxu0 %v259
    %v336 = vpop.f32.mrf.mxu0
    %v337 = vadd.f32 %v255, %v336
    %v338 = vpop.f32.mrf.mxu0
    %339 = vmatprep.mubr.f32.mxu0 0.0
    %340 = vmatmul.mubr.f32.gmra.mxu0 %v262
    %v341 = vpop.f32.mrf.mxu0
    %v342 = vadd.f32 %v255, %v341
    %v343 = vpop.f32.mrf.mxu0
    %344 = vmatprep.mubr.f32.mxu0 0.0
    %345 = vmatmul.mubr.f32.gmra.mxu0 %v265
    %v346 = vpop.f32.mrf.mxu0
    %v347 = vadd.f32 %v255, %v346
    %v348 = vpop.f32.mrf.mxu0
    %349 = vmatprep.mubr.f32.mxu0 0.0
    %350 = vmatmul.mubr.f32.gmra.mxu0 %v268
    %v351 = vpop.f32.mrf.mxu0
    %v352 = vadd.f32 %v255, %v351
    %v353 = vpop.f32.mrf.mxu0
    %354 = vdwg.mxu0
    %355 = vst [vmem:[#allocation2] sm:$0xff] %v337
    %356 = vst [vmem:[#allocation2 + $0x8] sm:$0xff] %v342
    %357 = vst [vmem:[#allocation2 + $0x10] sm:$0xff] %v347
    %358 = vst [vmem:[#allocation2 + $0x18] sm:$0xff] %v352
    // Predicated region
    $region22: #{tpu_custom_call.1} parent=1 // pred_check
      _
    $region23: #{tpu_custom_call.1} parent=1 // pred_check_branch
      %360 = sbr.rel (0) target = $region25
    $region24: #{tpu_custom_call.1} parent=1 // pred_region
      %s362 = ssub.s32 512, 512
      %363 = vsyncadd [#allocation3], %s362
      %s364 = sshll.u32 [#allocation2], 4
      %s365 = int_to_ptr.vmem [resolvable:$true] %s364
      %370 = dma.vmem_to_hbm [thread:$0]  %s365, 512, %s5, [#allocation3], 128, 128, 8
    $region25: #{tpu_custom_call.1} parent=1 // pred_fallthru
      _
    // Predicated region
    $region26: #{tpu_custom_call.1} parent=1 // pred_check
      _
    $region27: #{tpu_custom_call.1} parent=1 // pred_check_branch
      %372 = sbr.rel (0) target = $region29
    $region28: #{tpu_custom_call.1} parent=1 // pred_region
      %373 = dma.done [#allocation3], 512
    $region29: #{tpu_custom_call.1} parent=1 // pred_fallthru
      _
    %374 = vsyncpa [#allocation3], 1

</llo_original>
